<compile_context>
chip_gen: v7x
topology: tpu7x:2x2x1
jax: 0.10.0
libtpu: 0.0.40
codegen_flags: <defaults>
</compile_context>

<pallas_src>
import functools

import jax
import jax.numpy as jnp
from jax import lax
from jax.experimental import pallas as pl
from jax.experimental.pallas import tpu as pltpu


# Below this static sequence length the recurrence is fully unrolled in Python
# (best latency: everything stays in vregs, one slab store at the end).
_UNROLL_SEQ_LIMIT = 32


def _round_up(n, m):
    return ((n + m - 1) // m) * m


def _rnn_kernel(x_ref, wm_ref, bmn_ref, wn_ref, hseq_ref, *, activation):
    """Sequential RNN recurrence, fully resident in VMEM.

    x_ref    : (seq_len, input_size)  f32   (batch element 0 only)
    wm_ref   : (input_size, Hp)       f32   (W_m transposed, hidden-padded)
    bmn_ref  : (1, Hp)                f32   (b_m + b_n, hidden-padded)
    wn_ref   : (Hp, Hp)               f32   (W_n transposed, hidden-padded)
    hseq_ref : (seq_len, Hp)          f32   output (lane-dense slab)
    """
    seq_len = x_ref.shape[0]
    hp = hseq_ref.shape[1]

    def act(v):
        return jnp.tanh(v) if activation == 'tanh' else jnp.maximum(v, 0.0)

    # Hoisted input projection + fused biases: one well-shaped matmul for all
    # timesteps instead of seq_len degenerate (1, in) matvecs in the loop.
    xproj = (jnp.dot(x_ref[...], wm_ref[...],
                     preferred_element_type=jnp.float32)
             + bmn_ref[...])                                   # (seq_len, Hp)

    wn = wn_ref[...]                                           # (Hp, Hp)
    h0 = jnp.zeros((1, hp), jnp.float32)

    if seq_len <= _UNROLL_SEQ_LIMIT:
        # Fully unrolled recurrence; h lives in vregs, single slab store.
        h = h0
        rows = []
        for t in range(seq_len):
            pre = (jnp.dot(h, wn, preferred_element_type=jnp.float32)
                   + xproj[t:t + 1, :])
            h = act(pre)
            rows.append(h)
        hseq_ref[...] = jnp.concatenate(rows, axis=0)
    else:
        # Long-sequence fallback: stage xproj in the output slab, then loop.
        # h is still carried as a value; per-row stores are lane-dense (Hp).
        hseq_ref[...] = xproj

        def step(t, h):
            pre = (jnp.dot(h, wn, preferred_element_type=jnp.float32)
                   + hseq_ref[pl.ds(t, 1), :])
            h_new = act(pre)
            hseq_ref[pl.ds(t, 1), :] = h_new
            return h_new

        lax.fori_loop(0, seq_len, step, h0, unroll=8)
    # TODO(synk): for very large seq_len * hidden (v7x 64 MiB VMEM), switch to
    # a chunked grid over the sequence with h carried in a persistent scratch.


def rnn_forward(x, w_m, b_m, w_n, b_n, activation='tanh'):
    """Pallas equivalent of RNN.forward(x, h=None).

    x   : (seq_len, batch, input_size)
    w_m : (hidden, input_size), b_m: (hidden,)   -- nn.Linear(input, hidden)
    w_n : (hidden, hidden),     b_n: (hidden,)   -- nn.Linear(hidden, hidden)
    """
    seq_len, batch, input_size = x.shape
    hidden = w_m.shape[0]
    # The reference's `.reshape(x.shape)` only works when this holds:
    assert seq_len * hidden == x.size, "need hidden_size == batch * input_size"

    hp = _round_up(hidden, 128)          # lane-dense internal hidden layout
    pad = hp - hidden

    x0 = x[:, 0, :].astype(jnp.float32)                         # (seq_len, in)
    wm_t = jnp.pad(w_m.T.astype(jnp.float32), ((0, 0), (0, pad)))     # (in, Hp)
    wn_t = jnp.pad(w_n.T.astype(jnp.float32), ((0, pad), (0, pad)))   # (Hp, Hp)
    bmn = jnp.pad((b_m + b_n).astype(jnp.float32).reshape(1, hidden),
                  ((0, 0), (0, pad)))                                 # (1, Hp)

    kernel = functools.partial(_rnn_kernel, activation=activation)
    h_seq_p = pl.pallas_call(
        kernel,
        out_shape=jax.ShapeDtypeStruct((seq_len, hp), jnp.float32),
        in_specs=[pl.BlockSpec(memory_space=pltpu.MemorySpace.VMEM)] * 4,
        out_specs=pl.BlockSpec(memory_space=pltpu.MemorySpace.VMEM),
    )(x0, wm_t, bmn, wn_t)

    h_seq_flat = h_seq_p[:, :hidden]               # drop lane padding
    h_final = h_seq_flat[-1]                       # reference returns (hidden,)
    h_seq_out = h_seq_flat.reshape(x.shape)        # mirrors torch .reshape(x.shape)
    return h_seq_out, h_final
    # TODO(synk): reference also accepts an explicit h argument whose broadcast
    # semantics are ill-defined; only the documented h=None path is implemented.


def _rnn_reference(x, w_m, b_m, w_n, b_n, activation='tanh'):
    """Pure-JAX mirror of the PyTorch forward, for validation."""
    hidden = w_m.shape[0]
    h = jnp.zeros((hidden,), jnp.float32)
    hs = []
    for i in range(x.shape[0]):
        pre = w_n @ h + b_n + w_m @ x[i][0] + b_m
        h = jnp.tanh(pre) if activation == 'tanh' else jnp.maximum(pre, 0.0)
        hs.append(h)
    h_seq = jnp.stack(hs).reshape(x.shape)
    return h_seq, h


def _make_case(key, seq_len, batch, input_size, hidden):
    kx, k1, k2, k3, k4 = jax.random.split(key, 5)
    x = jax.random.normal(kx, (seq_len, batch, input_size), jnp.float32)
    # Deterministic nn.Linear-style init: U(-1/sqrt(fan_in), 1/sqrt(fan_in)).
    bm_bound = 1.0 / (input_size ** 0.5)
    bn_bound = 1.0 / (hidden ** 0.5)
    w_m = jax.random.uniform(k1, (hidden, input_size), jnp.float32,
                             -bm_bound, bm_bound)
    b_m = jax.random.uniform(k2, (hidden,), jnp.float32, -bm_bound, bm_bound)
    w_n = jax.random.uniform(k3, (hidden, hidden), jnp.float32,
                             -bn_bound, bn_bound)
    b_n = jax.random.uniform(k4, (hidden,), jnp.float32, -bn_bound, bn_bound)
    return x, w_m, b_m, w_n, b_n


if __name__ == "__main__":
    key = jax.random.PRNGKey(0)
    k_small, k_long = jax.random.split(key, 2)

    # Case 1: small shapes (unrolled path), tanh.  hidden == batch*input_size.
    x, w_m, b_m, w_n, b_n = _make_case(k_small, seq_len=8, batch=8,
                                       input_size=4, hidden=32)
    h_seq, h_last = rnn_forward(x, w_m, b_m, w_n, b_n, activation='tanh')
    jax.block_until_ready((h_seq, h_last))
    ref_seq, ref_last = _rnn_reference(x, w_m, b_m, w_n, b_n, activation='tanh')
    assert h_seq.shape == x.shape and h_last.shape == (32,)
    assert jnp.allclose(h_seq, ref_seq, atol=1e-5, rtol=1e-5)
    assert jnp.allclose(h_last, ref_last, atol=1e-5, rtol=1e-5)

    # Case 2: longer sequence (fori_loop fallback path), relu.
    x2, w_m2, b_m2, w_n2, b_n2 = _make_case(k_long, seq_len=40, batch=5,
                                            input_size=8, hidden=40)
    h_seq2, h_last2 = rnn_forward(x2, w_m2, b_m2, w_n2, b_n2, activation='relu')
    jax.block_until_ready((h_seq2, h_last2))
    ref_seq2, ref_last2 = _rnn_reference(x2, w_m2, b_m2, w_n2, b_n2,
                                         activation='relu')
    assert h_seq2.shape == x2.shape and h_last2.shape == (40,)
    assert jnp.allclose(h_seq2, ref_seq2, atol=1e-5, rtol=1e-5)
    assert jnp.allclose(h_last2, ref_last2, atol=1e-5, rtol=1e-5)

    print("KERNEL_OK")
</pallas_src>

<mosaic_0001>
module attributes {stable_mosaic.version = 11 : i64} {
  func.func @_rnn_kernel(%arg0: memref<8x4xf32, #tpu.memory_space<vmem>>, %arg1: memref<4x128xf32, #tpu.memory_space<vmem>>, %arg2: memref<1x128xf32, #tpu.memory_space<vmem>>, %arg3: memref<128x128xf32, #tpu.memory_space<vmem>>, %arg4: memref<8x128xf32, #tpu.memory_space<vmem>>) attributes {dimension_semantics = [], scalar_prefetch = 0 : i64, scratch_operands = 0 : i64, tpu.core_type = #tpu.core_type<tc>} {
    %c0 = arith.constant 0 : index
    %c0_0 = arith.constant 0 : index
    %0 = vector.load %arg0[%c0, %c0_0] : memref<8x4xf32, #tpu.memory_space<vmem>>, vector<8x4xf32>
    %c0_1 = arith.constant 0 : index
    %c0_2 = arith.constant 0 : index
    %1 = vector.load %arg1[%c0_1, %c0_2] : memref<4x128xf32, #tpu.memory_space<vmem>>, vector<4x128xf32>
    %cst = arith.constant dense<0.000000e+00> : vector<8x128xf32>
    %2 = tpu.matmul %0, %1, %cst {dimension_numbers = #tpu.dot_dimension_numbers<[1], [0], [0], [1], [0, 0, 1, 1], [], []>} : vector<8x4xf32>, vector<4x128xf32>, vector<8x128xf32> -> vector<8x128xf32>
    %c0_3 = arith.constant 0 : index
    %c0_4 = arith.constant 0 : index
    %3 = vector.load %arg2[%c0_3, %c0_4] : memref<1x128xf32, #tpu.memory_space<vmem>>, vector<1x128xf32>
    %4 = vector.broadcast %3 : vector<1x128xf32> to vector<8x128xf32>
    %5 = arith.addf %2, %4 : vector<8x128xf32>
    %c0_5 = arith.constant 0 : index
    %c0_6 = arith.constant 0 : index
    %6 = vector.load %arg3[%c0_5, %c0_6] : memref<128x128xf32, #tpu.memory_space<vmem>>, vector<128x128xf32>
    %cst_7 = arith.constant 0.000000e+00 : f32
    %7 = vector.broadcast %cst_7 : f32 to vector<1x128xf32>
    %cst_8 = arith.constant dense<0.000000e+00> : vector<1x128xf32>
    %8 = tpu.matmul %7, %6, %cst_8 {dimension_numbers = #tpu.dot_dimension_numbers<[1], [0], [0], [1], [0, 0, 1, 1], [], []>} : vector<1x128xf32>, vector<128x128xf32>, vector<1x128xf32> -> vector<1x128xf32>
    %9 = vector.extract_strided_slice %5 {offsets = [0, 0], sizes = [1, 128], strides = [1, 1]} : vector<8x128xf32> to vector<1x128xf32>
    %10 = arith.addf %8, %9 : vector<1x128xf32>
    %11 = math.tanh %10 : vector<1x128xf32>
    %cst_9 = arith.constant dense<0.000000e+00> : vector<1x128xf32>
    %12 = tpu.matmul %11, %6, %cst_9 {dimension_numbers = #tpu.dot_dimension_numbers<[1], [0], [0], [1], [0, 0, 1, 1], [], []>} : vector<1x128xf32>, vector<128x128xf32>, vector<1x128xf32> -> vector<1x128xf32>
    %13 = vector.extract_strided_slice %5 {offsets = [1, 0], sizes = [1, 128], strides = [1, 1]} : vector<8x128xf32> to vector<1x128xf32>
    %14 = arith.addf %12, %13 : vector<1x128xf32>
    %15 = math.tanh %14 : vector<1x128xf32>
    %cst_10 = arith.constant dense<0.000000e+00> : vector<1x128xf32>
    %16 = tpu.matmul %15, %6, %cst_10 {dimension_numbers = #tpu.dot_dimension_numbers<[1], [0], [0], [1], [0, 0, 1, 1], [], []>} : vector<1x128xf32>, vector<128x128xf32>, vector<1x128xf32> -> vector<1x128xf32>
    %17 = vector.extract_strided_slice %5 {offsets = [2, 0], sizes = [1, 128], strides = [1, 1]} : vector<8x128xf32> to vector<1x128xf32>
    %18 = arith.addf %16, %17 : vector<1x128xf32>
    %19 = math.tanh %18 : vector<1x128xf32>
    %cst_11 = arith.constant dense<0.000000e+00> : vector<1x128xf32>
    %20 = tpu.matmul %19, %6, %cst_11 {dimension_numbers = #tpu.dot_dimension_numbers<[1], [0], [0], [1], [0, 0, 1, 1], [], []>} : vector<1x128xf32>, vector<128x128xf32>, vector<1x128xf32> -> vector<1x128xf32>
    %21 = vector.extract_strided_slice %5 {offsets = [3, 0], sizes = [1, 128], strides = [1, 1]} : vector<8x128xf32> to vector<1x128xf32>
    %22 = arith.addf %20, %21 : vector<1x128xf32>
    %23 = math.tanh %22 : vector<1x128xf32>
    %cst_12 = arith.constant dense<0.000000e+00> : vector<1x128xf32>
    %24 = tpu.matmul %23, %6, %cst_12 {dimension_numbers = #tpu.dot_dimension_numbers<[1], [0], [0], [1], [0, 0, 1, 1], [], []>} : vector<1x128xf32>, vector<128x128xf32>, vector<1x128xf32> -> vector<1x128xf32>
    %25 = vector.extract_strided_slice %5 {offsets = [4, 0], sizes = [1, 128], strides = [1, 1]} : vector<8x128xf32> to vector<1x128xf32>
    %26 = arith.addf %24, %25 : vector<1x128xf32>
    %27 = math.tanh %26 : vector<1x128xf32>
    %cst_13 = arith.constant dense<0.000000e+00> : vector<1x128xf32>
    %28 = tpu.matmul %27, %6, %cst_13 {dimension_numbers = #tpu.dot_dimension_numbers<[1], [0], [0], [1], [0, 0, 1, 1], [], []>} : vector<1x128xf32>, vector<128x128xf32>, vector<1x128xf32> -> vector<1x128xf32>
    %29 = vector.extract_strided_slice %5 {offsets = [5, 0], sizes = [1, 128], strides = [1, 1]} : vector<8x128xf32> to vector<1x128xf32>
    %30 = arith.addf %28, %29 : vector<1x128xf32>
    %31 = math.tanh %30 : vector<1x128xf32>
    %cst_14 = arith.constant dense<0.000000e+00> : vector<1x128xf32>
    %32 = tpu.matmul %31, %6, %cst_14 {dimension_numbers = #tpu.dot_dimension_numbers<[1], [0], [0], [1], [0, 0, 1, 1], [], []>} : vector<1x128xf32>, vector<128x128xf32>, vector<1x128xf32> -> vector<1x128xf32>
    %33 = vector.extract_strided_slice %5 {offsets = [6, 0], sizes = [1, 128], strides = [1, 1]} : vector<8x128xf32> to vector<1x128xf32>
    %34 = arith.addf %32, %33 : vector<1x128xf32>
    %35 = math.tanh %34 : vector<1x128xf32>
    %cst_15 = arith.constant dense<0.000000e+00> : vector<1x128xf32>
    %36 = tpu.matmul %35, %6, %cst_15 {dimension_numbers = #tpu.dot_dimension_numbers<[1], [0], [0], [1], [0, 0, 1, 1], [], []>} : vector<1x128xf32>, vector<128x128xf32>, vector<1x128xf32> -> vector<1x128xf32>
    %37 = vector.extract_strided_slice %5 {offsets = [7, 0], sizes = [1, 128], strides = [1, 1]} : vector<8x128xf32> to vector<1x128xf32>
    %38 = arith.addf %36, %37 : vector<1x128xf32>
    %39 = math.tanh %38 : vector<1x128xf32>
    %40 = tpu.concatenate %11, %15, %19, %23, %27, %31, %35, %39 in 0 : vector<1x128xf32>, vector<1x128xf32>, vector<1x128xf32>, vector<1x128xf32>, vector<1x128xf32>, vector<1x128xf32>, vector<1x128xf32>, vector<1x128xf32> -> vector<8x128xf32>
    %c0_16 = arith.constant 0 : index
    %c0_17 = arith.constant 0 : index
    %41 = vector.load %arg4[%c0_16, %c0_17] : memref<8x128xf32, #tpu.memory_space<vmem>>, vector<8x128xf32>
    tpu.vector_store %arg4[%c0_16, %c0_17], %40 {strides = array<i32>} : memref<8x128xf32, #tpu.memory_space<vmem>>, vector<8x128xf32>,
    return
  }
}

</mosaic_0001>

<llo_original>
// kernel: tpu_custom_call.1
$region0: #{tpu_custom_call.1}
  #allocation0 [shape = 'u32[]', space=smem, size = 0x4, offset = 0x4, fixed_abs, tag = 'smem constant byte address 0x4 - core index']
  #allocation1 [shape = 'u32[144,128]{1,0:T(1,128)}', space=vmem, size = 0x12000, scoped, tag = 'internal scratch']
  %s0 = inlined_call_operand.vmem [shape: f32[8,4], index: 0, kind: input, shape index: {}]
  %s1 = inlined_call_operand.vmem [shape: f32[4,128], index: 1, kind: input, shape index: {}]
  %s2 = inlined_call_operand.vmem [shape: f32[1,128], index: 2, kind: input, shape index: {}]
  %s3 = inlined_call_operand.hbm [shape: f32[128,128], index: 3, kind: input, shape index: {}]
  %s4 = inlined_call_operand.hbm [shape: f32[8,128], index: 4, kind: output, shape index: {}]
  %s5 = sld [smem:[#allocation0]]
  $region30: #{tpu_custom_call.1} parent=0
    _
  %s7 = ssub.s32 1, %s5
  %s8 = scalar_select 0, %s7, %s5
  $region1: #{tpu_custom_call.1} parent=0
    #allocation2 [shape = 'u8[65536]{0}', space=vmem, size = 0x10000, scoped, tag = 'input window, operand 3, single buffered']
    #allocation3 [shape = 's32[1]{0}', space=sflag, size = 0x4, scoped, tag = 'scoped memory for tpu_custom_call.1']
    #allocation4 [shape = 's32[1]{0}', space=sflag, size = 0x4, scoped, tag = 'scoped memory for tpu_custom_call.1']
    #allocation5 [shape = 'u8[4096]{0}', space=vmem, size = 0x1000, scoped, tag = 'output window, operand 0, single buffered']
    %9 = vsyncpa [#allocation3], 0
    %10 = vsyncpa [#allocation4], 0
    // Predicated region
    $region2: #{tpu_custom_call.1} parent=1 // pred_check
      _
    $region3: #{tpu_custom_call.1} parent=1 // pred_check_branch
      %12 = sbr.rel (0) target = $region5
    $region4: #{tpu_custom_call.1} parent=1 // pred_region
      _
    $region5: #{tpu_custom_call.1} parent=1 // pred_fallthru
      _
    // Predicated region
    $region6: #{tpu_custom_call.1} parent=1 // pred_check
      _
    $region7: #{tpu_custom_call.1} parent=1 // pred_check_branch
      %14 = sbr.rel (0) target = $region9
    $region8: #{tpu_custom_call.1} parent=1 // pred_region
      _
    $region9: #{tpu_custom_call.1} parent=1 // pred_fallthru
      _
    // Predicated region
    $region10: #{tpu_custom_call.1} parent=1 // pred_check
      _
    $region11: #{tpu_custom_call.1} parent=1 // pred_check_branch
      %16 = sbr.rel (0) target = $region13
    $region12: #{tpu_custom_call.1} parent=1 // pred_region
      _
    $region13: #{tpu_custom_call.1} parent=1 // pred_fallthru
      _
    // Predicated region
    $region14: #{tpu_custom_call.1} parent=1 // pred_check
      _
    $region15: #{tpu_custom_call.1} parent=1 // pred_check_branch
      %18 = sbr.rel (0) target = $region17
    $region16: #{tpu_custom_call.1} parent=1 // pred_region
      %s20 = ssub.s32 2048, 2048
      %21 = vsyncadd [#allocation3], %s20
      %s22 = sshll.u32 [#allocation2], 4
      %s23 = int_to_ptr.vmem [resolvable:$true] %s22
      %28 = dma.hbm_to_vmem [thread:$0]  %s3, 2048, %s23, [#allocation3], 128, 128, 8
    $region17: #{tpu_custom_call.1} parent=1 // pred_fallthru
      _
    // Predicated region
    $region18: #{tpu_custom_call.1} parent=1 // pred_check
      _
    $region19: #{tpu_custom_call.1} parent=1 // pred_check_branch
      %30 = sbr.rel (0) target = $region21
    $region20: #{tpu_custom_call.1} parent=1 // pred_region
      %31 = dma.done [#allocation3], 2048
    $region21: #{tpu_custom_call.1} parent=1 // pred_fallthru
      _
    %v32 = vld [vmem:[%s0] sm:$0xff]
    %v33 = vld [vmem:[%s1] sm:$0xf]
    %v34 = vld [vmem:[%s2] sm:$0x1]
    %v36 = vlaneseq
    %v37 = vshrl.u32 %v36, 7
    %v38 = vsub.s32 0, %v37
    %v39 = vrot.slane %v34, %v38
    %vm41 = vcmask 31744
    %v43 = vsel %vm41, %v32, 0
    %vm45 = vcmask 1043456
    %v47 = vsel %vm45, %v33, 0
    %49 = vmatprep.subr.mxu0 0.0
    %50 = vmatpush1.msra.mxu0 %v47
    %51 = vmatprep.subr.mxu0 0.0
    %52 = vmatpush1.msra.mxu0 0.0
    %53 = vmatprep.subr.mxu0 0.0
    %54 = vmatpush1.msra.mxu0 0.0
    %55 = vmatprep.subr.mxu0 0.0
    %56 = vmatpush1.msra.mxu0 0.0
    %57 = vmatprep.subr.mxu0 0.0
    %58 = vmatpush1.msra.mxu0 0.0
    %59 = vmatprep.subr.mxu0 0.0
    %60 = vmatpush1.msra.mxu0 0.0
    %61 = vmatprep.subr.mxu0 0.0
    %62 = vmatpush1.msra.mxu0 0.0
    %63 = vmatprep.subr.mxu0 0.0
    %64 = vmatpush1.msra.mxu0 0.0
    %65 = vmatprep.subr.mxu0 0.0
    %66 = vmatpush1.msra.mxu0 0.0
    %67 = vmatprep.subr.mxu0 0.0
    %68 = vmatpush1.msra.mxu0 0.0
    %69 = vmatprep.subr.mxu0 0.0
    %70 = vmatpush1.msra.mxu0 0.0
    %71 = vmatprep.subr.mxu0 0.0
    %72 = vmatpush1.msra.mxu0 0.0
    %73 = vmatprep.subr.mxu0 0.0
    %74 = vmatpush1.msra.mxu0 0.0
    %75 = vmatprep.subr.mxu0 0.0
    %76 = vmatpush1.msra.mxu0 0.0
    %77 = vmatprep.subr.mxu0 0.0
    %78 = vmatpush1.msra.mxu0 0.0
    %79 = vmatprep.subr.mxu0 0.0
    %80 = vmatpush1.msra.mxu0 0.0
    %81 = vmatprep.subr.mxu0 0.0
    %82 = vmatpush1.msra.mxu0 0.0
    %83 = vmatprep.subr.mxu0 0.0
    %84 = vmatpush1.msra.mxu0 0.0
    %85 = vmatprep.subr.mxu0 0.0
    %86 = vmatpush1.msra.mxu0 0.0
    %87 = vmatprep.subr.mxu0 0.0
    %88 = vmatpush1.msra.mxu0 0.0
    %89 = vmatprep.subr.mxu0 0.0
    %90 = vmatpush1.msra.mxu0 0.0
    %91 = vmatprep.subr.mxu0 0.0
    %92 = vmatpush1.msra.mxu0 0.0
    %93 = vmatprep.subr.mxu0 0.0
    %94 = vmatpush1.msra.mxu0 0.0
    %95 = vmatprep.subr.mxu0 0.0
    %96 = vmatpush1.msra.mxu0 0.0
    %97 = vmatprep.subr.mxu0 0.0
    %98 = vmatpush1.msra.mxu0 0.0
    %99 = vmatprep.subr.mxu0 0.0
    %100 = vmatpush1.msra.mxu0 0.0
    %101 = vmatprep.subr.mxu0 0.0
    %102 = vmatpush1.msra.mxu0 0.0
    %103 = vmatprep.subr.mxu0 0.0
    %104 = vmatpush1.msra.mxu0 0.0
    %105 = vmatprep.subr.mxu0 0.0
    %106 = vmatpush1.msra.mxu0 0.0
    %107 = vmatprep.subr.mxu0 0.0
    %108 = vmatpush1.msra.mxu0 0.0
    %109 = vmatprep.subr.mxu0 0.0
    %110 = vmatpush1.msra.mxu0 0.0
    %111 = vmatprep.subr.mxu0 0.0
    %112 = vmatpush1.msra.mxu0 0.0
    %113 = vmatprep.mubr.f32.mxu0 0.0
    %114 = vmatmul.mubr.f32.gmra.mrb[0].mxu0 %v43
    %v115 = vpop.f32.mrb[0].mxu0
    %v116 = vadd.f32 %v39, %v115
    %v117 = vpop.f32.mrb[0].mxu0
    %118 = vdwg.mxu0
    %v119 = vld [vmem:[#allocation2] sm:$0xff]
    %v120 = vld [vmem:[#allocation2 + $0x8] sm:$0xff]
    %v121 = vld [vmem:[#allocation2 + $0x10] sm:$0xff]
    %v122 = vld [vmem:[#allocation2 + $0x18] sm:$0xff]
    %v123 = vld [vmem:[#allocation2 + $0x20] sm:$0xff]
    %v124 = vld [vmem:[#allocation2 + $0x28] sm:$0xff]
    %v125 = vld [vmem:[#allocation2 + $0x30] sm:$0xff]
    %v126 = vld [vmem:[#allocation2 + $0x38] sm:$0xff]
    %v127 = vld [vmem:[#allocation2 + $0x40] sm:$0xff]
    %v128 = vld [vmem:[#allocation2 + $0x48] sm:$0xff]
    %v129 = vld [vmem:[#allocation2 + $0x50] sm:$0xff]
    %v130 = vld [vmem:[#allocation2 + $0x58] sm:$0xff]
    %v131 = vld [vmem:[#allocation2 + $0x60] sm:$0xff]
    %v132 = vld [vmem:[#allocation2 + $0x68] sm:$0xff]
    %v133 = vld [vmem:[#allocation2 + $0x70] sm:$0xff]
    %v134 = vld [vmem:[#allocation2 + $0x78] sm:$0xff]
    %135 = vmatprep.subr.mxu0 0.0
    %136 = vmatpush1.msra.mxu0 %v119
    %137 = vmatprep.subr.mxu0 0.0
    %138 = vmatpush1.msra.mxu0 %v120
    %139 = vmatprep.subr.mxu0 0.0
    %140 = vmatpush1.msra.mxu0 %v121
    %141 = vmatprep.subr.mxu0 0.0
    %142 = vmatpush1.msra.mxu0 %v122
    %143 = vmatprep.subr.mxu0 0.0
    %144 = vmatpush1.msra.mxu0 %v123
    %145 = vmatprep.subr.mxu0 0.0
    %146 = vmatpush1.msra.mxu0 %v124
    %147 = vmatprep.subr.mxu0 0.0
    %148 = vmatpush1.msra.mxu0 %v125
    %149 = vmatprep.subr.mxu0 0.0
    %150 = vmatpush1.msra.mxu0 %v126
    %151 = vmatprep.subr.mxu0 0.0
    %152 = vmatpush1.msra.mxu0 %v127
    %153 = vmatprep.subr.mxu0 0.0
    %154 = vmatpush1.msra.mxu0 %v128
    %155 = vmatprep.subr.mxu0 0.0
    %156 = vmatpush1.msra.mxu0 %v129
    %157 = vmatprep.subr.mxu0 0.0
    %158 = vmatpush1.msra.mxu0 %v130
    %159 = vmatprep.subr.mxu0 0.0
    %160 = vmatpush1.msra.mxu0 %v131
    %161 = vmatprep.subr.mxu0 0.0
    %162 = vmatpush1.msra.mxu0 %v132
    %163 = vmatprep.subr.mxu0 0.0
    %164 = vmatpush1.msra.mxu0 %v133
    %165 = vmatprep.subr.mxu0 0.0
    %166 = vmatpush1.msra.mxu0 %v134
    %167 = vmatprep.subr.mxu0 0.0
    %168 = vmatpush1.msra.mxu0 0.0
    %169 = vmatprep.subr.mxu0 0.0
    %170 = vmatpush1.msra.mxu0 0.0
    %171 = vmatprep.subr.mxu0 0.0
    %172 = vmatpush1.msra.mxu0 0.0
    %173 = vmatprep.subr.mxu0 0.0
    %174 = vmatpush1.msra.mxu0 0.0
    %175 = vmatprep.subr.mxu0 0.0
    %176 = vmatpush1.msra.mxu0 0.0
    %177 = vmatprep.subr.mxu0 0.0
    %178 = vmatpush1.msra.mxu0 0.0
    %179 = vmatprep.subr.mxu0 0.0
    %180 = vmatpush1.msra.mxu0 0.0
    %181 = vmatprep.subr.mxu0 0.0
    %182 = vmatpush1.msra.mxu0 0.0
    %183 = vmatprep.subr.mxu0 0.0
    %184 = vmatpush1.msra.mxu0 0.0
    %185 = vmatprep.subr.mxu0 0.0
    %186 = vmatpush1.msra.mxu0 0.0
    %187 = vmatprep.subr.mxu0 0.0
    %188 = vmatpush1.msra.mxu0 0.0
    %189 = vmatprep.subr.mxu0 0.0
    %190 = vmatpush1.msra.mxu0 0.0
    %191 = vmatprep.subr.mxu0 0.0
    %192 = vmatpush1.msra.mxu0 0.0
    %193 = vmatprep.subr.mxu0 0.0
    %194 = vmatpush1.msra.mxu0 0.0
    %195 = vmatprep.subr.mxu0 0.0
    %196 = vmatpush1.msra.mxu0 0.0
    %197 = vmatprep.subr.mxu0 0.0
    %198 = vmatpush1.msra.mxu0 0.0
    %199 = vmatprep.mubr.f32.mxu0 0.0
    %200 = vmatmul.mubr.f32.gmra.mrb[0].mxu0 0.0
    %v201 = vpop.f32.mrb[0].mxu0
    %v202 = vadd.f32 %v116, %v201
    %v203 = vpop.f32.mrb[0].mxu0
    %204 = vdwg.mxu0
    %v205 = vtanh.pop %v202
    %v207 = vrot.slane %v116, 1
    %209 = vmatprep.subr.mxu0 0.0
    %210 = vmatpush1.msra.mxu0 %v119
    %211 = vmatprep.subr.mxu0 0.0
    %212 = vmatpush1.msra.mxu0 %v120
    %213 = vmatprep.subr.mxu0 0.0
    %214 = vmatpush1.msra.mxu0 %v121
    %215 = vmatprep.subr.mxu0 0.0
    %216 = vmatpush1.msra.mxu0 %v122
    %217 = vmatprep.subr.mxu0 0.0
    %218 = vmatpush1.msra.mxu0 %v123
    %219 = vmatprep.subr.mxu0 0.0
    %220 = vmatpush1.msra.mxu0 %v124
    %221 = vmatprep.subr.mxu0 0.0
    %222 = vmatpush1.msra.mxu0 %v125
    %223 = vmatprep.subr.mxu0 0.0
    %224 = vmatpush1.msra.mxu0 %v126
    %225 = vmatprep.subr.mxu0 0.0
    %226 = vmatpush1.msra.mxu0 %v127
    %227 = vmatprep.subr.mxu0 0.0
    %228 = vmatpush1.msra.mxu0 %v128
    %229 = vmatprep.subr.mxu0 0.0
    %230 = vmatpush1.msra.mxu0 %v129
    %231 = vmatprep.subr.mxu0 0.0
    %232 = vmatpush1.msra.mxu0 %v130
    %233 = vmatprep.subr.mxu0 0.0
    %234 = vmatpush1.msra.mxu0 %v131
    %235 = vmatprep.subr.mxu0 0.0
    %236 = vmatpush1.msra.mxu0 %v132
    %237 = vmatprep.subr.mxu0 0.0
    %238 = vmatpush1.msra.mxu0 %v133
    %239 = vmatprep.subr.mxu0 0.0
    %240 = vmatpush1.msra.mxu0 %v134
    %241 = vmatprep.subr.mxu0 0.0
    %242 = vmatpush1.msra.mxu0 0.0
    %243 = vmatprep.subr.mxu0 0.0
    %244 = vmatpush1.msra.mxu0 0.0
    %245 = vmatprep.subr.mxu0 0.0
    %246 = vmatpush1.msra.mxu0 0.0
    %247 = vmatprep.subr.mxu0 0.0
    %248 = vmatpush1.msra.mxu0 0.0
    %249 = vmatprep.subr.mxu0 0.0
    %250 = vmatpush1.msra.mxu0 0.0
    %251 = vmatprep.subr.mxu0 0.0
    %252 = vmatpush1.msra.mxu0 0.0
    %253 = vmatprep.subr.mxu0 0.0
    %254 = vmatpush1.msra.mxu0 0.0
    %255 = vmatprep.subr.mxu0 0.0
    %256 = vmatpush1.msra.mxu0 0.0
    %257 = vmatprep.subr.mxu0 0.0
    %258 = vmatpush1.msra.mxu0 0.0
    %259 = vmatprep.subr.mxu0 0.0
    %260 = vmatpush1.msra.mxu0 0.0
    %261 = vmatprep.subr.mxu0 0.0
    %262 = vmatpush1.msra.mxu0 0.0
    %263 = vmatprep.subr.mxu0 0.0
    %264 = vmatpush1.msra.mxu0 0.0
    %265 = vmatprep.subr.mxu0 0.0
    %266 = vmatpush1.msra.mxu0 0.0
    %267 = vmatprep.subr.mxu0 0.0
    %268 = vmatpush1.msra.mxu0 0.0
    %269 = vmatprep.subr.mxu0 0.0
    %270 = vmatpush1.msra.mxu0 0.0
    %271 = vmatprep.subr.mxu0 0.0
    %272 = vmatpush1.msra.mxu0 0.0
    %273 = vmatprep.mubr.f32.mxu0 0.0
    %274 = vmatmul.mubr.f32.gmra.mrb[0].mxu0 %v205
    %v275 = vpop.f32.mrb[0].mxu0
    %v276 = vadd.f32 %v207, %v275
    %v277 = vpop.f32.mrb[0].mxu0
    %278 = vdwg.mxu0
    %v279 = vtanh.pop %v276
    %v280 = vrot.slane %v116, 2
    %282 = vmatprep.subr.mxu0 0.0
    %283 = vmatpush1.msra.mxu0 %v119
    %284 = vmatprep.subr.mxu0 0.0
    %285 = vmatpush1.msra.mxu0 %v120
    %286 = vmatprep.subr.mxu0 0.0
    %287 = vmatpush1.msra.mxu0 %v121
    %288 = vmatprep.subr.mxu0 0.0
    %289 = vmatpush1.msra.mxu0 %v122
    %290 = vmatprep.subr.mxu0 0.0
    %291 = vmatpush1.msra.mxu0 %v123
    %292 = vmatprep.subr.mxu0 0.0
    %293 = vmatpush1.msra.mxu0 %v124
    %294 = vmatprep.subr.mxu0 0.0
    %295 = vmatpush1.msra.mxu0 %v125
    %296 = vmatprep.subr.mxu0 0.0
    %297 = vmatpush1.msra.mxu0 %v126
    %298 = vmatprep.subr.mxu0 0.0
    %299 = vmatpush1.msra.mxu0 %v127
    %300 = vmatprep.subr.mxu0 0.0
    %301 = vmatpush1.msra.mxu0 %v128
    %302 = vmatprep.subr.mxu0 0.0
    %303 = vmatpush1.msra.mxu0 %v129
    %304 = vmatprep.subr.mxu0 0.0
    %305 = vmatpush1.msra.mxu0 %v130
    %306 = vmatprep.subr.mxu0 0.0
    %307 = vmatpush1.msra.mxu0 %v131
    %308 = vmatprep.subr.mxu0 0.0
    %309 = vmatpush1.msra.mxu0 %v132
    %310 = vmatprep.subr.mxu0 0.0
    %311 = vmatpush1.msra.mxu0 %v133
    %312 = vmatprep.subr.mxu0 0.0
    %313 = vmatpush1.msra.mxu0 %v134
    %314 = vmatprep.subr.mxu0 0.0
    %315 = vmatpush1.msra.mxu0 0.0
    %316 = vmatprep.subr.mxu0 0.0
    %317 = vmatpush1.msra.mxu0 0.0
    %318 = vmatprep.subr.mxu0 0.0
    %319 = vmatpush1.msra.mxu0 0.0
    %320 = vmatprep.subr.mxu0 0.0
    %321 = vmatpush1.msra.mxu0 0.0
    %322 = vmatprep.subr.mxu0 0.0
    %323 = vmatpush1.msra.mxu0 0.0
    %324 = vmatprep.subr.mxu0 0.0
    %325 = vmatpush1.msra.mxu0 0.0
    %326 = vmatprep.subr.mxu0 0.0
    %327 = vmatpush1.msra.mxu0 0.0
    %328 = vmatprep.subr.mxu0 0.0
    %329 = vmatpush1.msra.mxu0 0.0
    %330 = vmatprep.subr.mxu0 0.0
    %331 = vmatpush1.msra.mxu0 0.0
    %332 = vmatprep.subr.mxu0 0.0
    %333 = vmatpush1.msra.mxu0 0.0
    %334 = vmatprep.subr.mxu0 0.0
    %335 = vmatpush1.msra.mxu0 0.0
    %336 = vmatprep.subr.mxu0 0.0
    %337 = vmatpush1.msra.mxu0 0.0
    %338 = vmatprep.subr.mxu0 0.0
    %339 = vmatpush1.msra.mxu0 0.0
    %340 = vmatprep.subr.mxu0 0.0
    %341 = vmatpush1.msra.mxu0 0.0
    %342 = vmatprep.subr.mxu0 0.0
    %343 = vmatpush1.msra.mxu0 0.0
    %344 = vmatprep.subr.mxu0 0.0
    %345 = vmatpush1.msra.mxu0 0.0
    %346 = vmatprep.mubr.f32.mxu0 0.0
    %347 = vmatmul.mubr.f32.gmra.mrb[0].mxu0 %v279
    %v348 = vpop.f32.mrb[0].mxu0
    %v349 = vadd.f32 %v280, %v348
    %v350 = vpop.f32.mrb[0].mxu0
    %351 = vdwg.mxu0
    %v352 = vtanh.pop %v349
    %v353 = vrot.slane %v116, 3
    %355 = vmatprep.subr.mxu0 0.0
    %356 = vmatpush1.msra.mxu0 %v119
    %357 = vmatprep.subr.mxu0 0.0
    %358 = vmatpush1.msra.mxu0 %v120
    %359 = vmatprep.subr.mxu0 0.0
    %360 = vmatpush1.msra.mxu0 %v121
    %361 = vmatprep.subr.mxu0 0.0
    %362 = vmatpush1.msra.mxu0 %v122
    %363 = vmatprep.subr.mxu0 0.0
    %364 = vmatpush1.msra.mxu0 %v123
    %365 = vmatprep.subr.mxu0 0.0
    %366 = vmatpush1.msra.mxu0 %v124
    %367 = vmatprep.subr.mxu0 0.0
    %368 = vmatpush1.msra.mxu0 %v125
    %369 = vmatprep.subr.mxu0 0.0
    %370 = vmatpush1.msra.mxu0 %v126
    %371 = vmatprep.subr.mxu0 0.0
    %372 = vmatpush1.msra.mxu0 %v127
    %373 = vmatprep.subr.mxu0 0.0
    %374 = vmatpush1.msra.mxu0 %v128
    %375 = vmatprep.subr.mxu0 0.0
    %376 = vmatpush1.msra.mxu0 %v129
    %377 = vmatprep.subr.mxu0 0.0
    %378 = vmatpush1.msra.mxu0 %v130
    %379 = vmatprep.subr.mxu0 0.0
    %380 = vmatpush1.msra.mxu0 %v131
    %381 = vmatprep.subr.mxu0 0.0
    %382 = vmatpush1.msra.mxu0 %v132
    %383 = vmatprep.subr.mxu0 0.0
    %384 = vmatpush1.msra.mxu0 %v133
    %385 = vmatprep.subr.mxu0 0.0
    %386 = vmatpush1.msra.mxu0 %v134
    %387 = vmatprep.subr.mxu0 0.0
    %388 = vmatpush1.msra.mxu0 0.0
    %389 = vmatprep.subr.mxu0 0.0
    %390 = vmatpush1.msra.mxu0 0.0
    %391 = vmatprep.subr.mxu0 0.0
    %392 = vmatpush1.msra.mxu0 0.0
    %393 = vmatprep.subr.mxu0 0.0
    %394 = vmatpush1.msra.mxu0 0.0
    %395 = vmatprep.subr.mxu0 0.0
    %396 = vmatpush1.msra.mxu0 0.0
    %397 = vmatprep.subr.mxu0 0.0
    %398 = vmatpush1.msra.mxu0 0.0
    %399 = vmatprep.subr.mxu0 0.0
    %400 = vmatpush1.msra.mxu0 0.0
    %401 = vmatprep.subr.mxu0 0.0
    %402 = vmatpush1.msra.mxu0 0.0
    %403 = vmatprep.subr.mxu0 0.0
    %404 = vmatpush1.msra.mxu0 0.0
    %405 = vmatprep.subr.mxu0 0.0
    %406 = vmatpush1.msra.mxu0 0.0
    %407 = vmatprep.subr.mxu0 0.0
    %408 = vmatpush1.msra.mxu0 0.0
    %409 = vmatprep.subr.mxu0 0.0
    %410 = vmatpush1.msra.mxu0 0.0
    %411 = vmatprep.subr.mxu0 0.0
    %412 = vmatpush1.msra.mxu0 0.0
    %413 = vmatprep.subr.mxu0 0.0
    %414 = vmatpush1.msra.mxu0 0.0
    %415 = vmatprep.subr.mxu0 0.0
    %416 = vmatpush1.msra.mxu0 0.0
    %417 = vmatprep.subr.mxu0 0.0
    %418 = vmatpush1.msra.mxu0 0.0
    %419 = vmatprep.mubr.f32.mxu0 0.0
    %420 = vmatmul.mubr.f32.gmra.mrb[0].mxu0 %v352
    %v421 = vpop.f32.mrb[0].mxu0
    %v422 = vadd.f32 %v353, %v421
    %v423 = vpop.f32.mrb[0].mxu0
    %424 = vdwg.mxu0
    %v425 = vtanh.pop %v422
    %v426 = vrot.slane %v116, 4
    %428 = vmatprep.subr.mxu0 0.0
    %429 = vmatpush1.msra.mxu0 %v119
    %430 = vmatprep.subr.mxu0 0.0
    %431 = vmatpush1.msra.mxu0 %v120
    %432 = vmatprep.subr.mxu0 0.0
    %433 = vmatpush1.msra.mxu0 %v121
    %434 = vmatprep.subr.mxu0 0.0
    %435 = vmatpush1.msra.mxu0 %v122
    %436 = vmatprep.subr.mxu0 0.0
    %437 = vmatpush1.msra.mxu0 %v123
    %438 = vmatprep.subr.mxu0 0.0
    %439 = vmatpush1.msra.mxu0 %v124
    %440 = vmatprep.subr.mxu0 0.0
    %441 = vmatpush1.msra.mxu0 %v125
    %442 = vmatprep.subr.mxu0 0.0
    %443 = vmatpush1.msra.mxu0 %v126
    %444 = vmatprep.subr.mxu0 0.0
    %445 = vmatpush1.msra.mxu0 %v127
    %446 = vmatprep.subr.mxu0 0.0
    %447 = vmatpush1.msra.mxu0 %v128
    %448 = vmatprep.subr.mxu0 0.0
    %449 = vmatpush1.msra.mxu0 %v129
    %450 = vmatprep.subr.mxu0 0.0
    %451 = vmatpush1.msra.mxu0 %v130
    %452 = vmatprep.subr.mxu0 0.0
    %453 = vmatpush1.msra.mxu0 %v131
    %454 = vmatprep.subr.mxu0 0.0
    %455 = vmatpush1.msra.mxu0 %v132
    %456 = vmatprep.subr.mxu0 0.0
    %457 = vmatpush1.msra.mxu0 %v133
    %458 = vmatprep.subr.mxu0 0.0
    %459 = vmatpush1.msra.mxu0 %v134
    %460 = vmatprep.subr.mxu0 0.0
    %461 = vmatpush1.msra.mxu0 0.0
    %462 = vmatprep.subr.mxu0 0.0
    %463 = vmatpush1.msra.mxu0 0.0
    %464 = vmatprep.subr.mxu0 0.0
    %465 = vmatpush1.msra.mxu0 0.0
    %466 = vmatprep.subr.mxu0 0.0
    %467 = vmatpush1.msra.mxu0 0.0
    %468 = vmatprep.subr.mxu0 0.0
    %469 = vmatpush1.msra.mxu0 0.0
    %470 = vmatprep.subr.mxu0 0.0
    %471 = vmatpush1.msra.mxu0 0.0
    %472 = vmatprep.subr.mxu0 0.0
    %473 = vmatpush1.msra.mxu0 0.0
    %474 = vmatprep.subr.mxu0 0.0
    %475 = vmatpush1.msra.mxu0 0.0
    %476 = vmatprep.subr.mxu0 0.0
    %477 = vmatpush1.msra.mxu0 0.0
    %478 = vmatprep.subr.mxu0 0.0
    %479 = vmatpush1.msra.mxu0 0.0
    %480 = vmatprep.subr.mxu0 0.0
    %481 = vmatpush1.msra.mxu0 0.0
    %482 = vmatprep.subr.mxu0 0.0
    %483 = vmatpush1.msra.mxu0 0.0
    %484 = vmatprep.subr.mxu0 0.0
    %485 = vmatpush1.msra.mxu0 0.0
    %486 = vmatprep.subr.mxu0 0.0
    %487 = vmatpush1.msra.mxu0 0.0
    %488 = vmatprep.subr.mxu0 0.0
    %489 = vmatpush1.msra.mxu0 0.0
    %490 = vmatprep.subr.mxu0 0.0
    %491 = vmatpush1.msra.mxu0 0.0
    %492 = vmatprep.mubr.f32.mxu0 0.0
    %493 = vmatmul.mubr.f32.gmra.mrb[0].mxu0 %v425
    %v494 = vpop.f32.mrb[0].mxu0
    %v495 = vadd.f32 %v426, %v494
    %v496 = vpop.f32.mrb[0].mxu0
    %497 = vdwg.mxu0
    %v498 = vtanh.pop %v495
    %v499 = vrot.slane %v116, 5
    %501 = vmatprep.subr.mxu0 0.0
    %502 = vmatpush1.msra.mxu0 %v119
    %503 = vmatprep.subr.mxu0 0.0
    %504 = vmatpush1.msra.mxu0 %v120
    %505 = vmatprep.subr.mxu0 0.0
    %506 = vmatpush1.msra.mxu0 %v121
    %507 = vmatprep.subr.mxu0 0.0
    %508 = vmatpush1.msra.mxu0 %v122
    %509 = vmatprep.subr.mxu0 0.0
    %510 = vmatpush1.msra.mxu0 %v123
    %511 = vmatprep.subr.mxu0 0.0
    %512 = vmatpush1.msra.mxu0 %v124
    %513 = vmatprep.subr.mxu0 0.0
    %514 = vmatpush1.msra.mxu0 %v125
    %515 = vmatprep.subr.mxu0 0.0
    %516 = vmatpush1.msra.mxu0 %v126
    %517 = vmatprep.subr.mxu0 0.0
    %518 = vmatpush1.msra.mxu0 %v127
    %519 = vmatprep.subr.mxu0 0.0
    %520 = vmatpush1.msra.mxu0 %v128
    %521 = vmatprep.subr.mxu0 0.0
    %522 = vmatpush1.msra.mxu0 %v129
    %523 = vmatprep.subr.mxu0 0.0
    %524 = vmatpush1.msra.mxu0 %v130
    %525 = vmatprep.subr.mxu0 0.0
    %526 = vmatpush1.msra.mxu0 %v131
    %527 = vmatprep.subr.mxu0 0.0
    %528 = vmatpush1.msra.mxu0 %v132
    %529 = vmatprep.subr.mxu0 0.0
    %530 = vmatpush1.msra.mxu0 %v133
    %531 = vmatprep.subr.mxu0 0.0
    %532 = vmatpush1.msra.mxu0 %v134
    %533 = vmatprep.subr.mxu0 0.0
    %534 = vmatpush1.msra.mxu0 0.0
    %535 = vmatprep.subr.mxu0 0.0
    %536 = vmatpush1.msra.mxu0 0.0
    %537 = vmatprep.subr.mxu0 0.0
    %538 = vmatpush1.msra.mxu0 0.0
    %539 = vmatprep.subr.mxu0 0.0
    %540 = vmatpush1.msra.mxu0 0.0
    %541 = vmatprep.subr.mxu0 0.0
    %542 = vmatpush1.msra.mxu0 0.0
    %543 = vmatprep.subr.mxu0 0.0
    %544 = vmatpush1.msra.mxu0 0.0
    %545 = vmatprep.subr.mxu0 0.0
    %546 = vmatpush1.msra.mxu0 0.0
    %547 = vmatprep.subr.mxu0 0.0
    %548 = vmatpush1.msra.mxu0 0.0
    %549 = vmatprep.subr.mxu0 0.0
    %550 = vmatpush1.msra.mxu0 0.0
    %551 = vmatprep.subr.mxu0 0.0
    %552 = vmatpush1.msra.mxu0 0.0
    %553 = vmatprep.subr.mxu0 0.0
    %554 = vmatpush1.msra.mxu0 0.0
    %555 = vmatprep.subr.mxu0 0.0
    %556 = vmatpush1.msra.mxu0 0.0
    %557 = vmatprep.subr.mxu0 0.0
    %558 = vmatpush1.msra.mxu0 0.0
    %559 = vmatprep.subr.mxu0 0.0
    %560 = vmatpush1.msra.mxu0 0.0
    %561 = vmatprep.subr.mxu0 0.0
    %562 = vmatpush1.msra.mxu0 0.0
    %563 = vmatprep.subr.mxu0 0.0
    %564 = vmatpush1.msra.mxu0 0.0
    %565 = vmatprep.mubr.f32.mxu0 0.0
    %566 = vmatmul.mubr.f32.gmra.mrb[0].mxu0 %v498
    %v567 = vpop.f32.mrb[0].mxu0
    %v568 = vadd.f32 %v499, %v567
    %v569 = vpop.f32.mrb[0].mxu0
    %570 = vdwg.mxu0
    %v571 = vtanh.pop %v568
    %v572 = vrot.slane %v116, 6
    %574 = vmatprep.subr.mxu0 0.0
    %575 = vmatpush1.msra.mxu0 %v119
    %576 = vmatprep.subr.mxu0 0.0
    %577 = vmatpush1.msra.mxu0 %v120
    %578 = vmatprep.subr.mxu0 0.0
    %579 = vmatpush1.msra.mxu0 %v121
    %580 = vmatprep.subr.mxu0 0.0
    %581 = vmatpush1.msra.mxu0 %v122
    %582 = vmatprep.subr.mxu0 0.0
    %583 = vmatpush1.msra.mxu0 %v123
    %584 = vmatprep.subr.mxu0 0.0
    %585 = vmatpush1.msra.mxu0 %v124
    %586 = vmatprep.subr.mxu0 0.0
    %587 = vmatpush1.msra.mxu0 %v125
    %588 = vmatprep.subr.mxu0 0.0
    %589 = vmatpush1.msra.mxu0 %v126
    %590 = vmatprep.subr.mxu0 0.0
    %591 = vmatpush1.msra.mxu0 %v127
    %592 = vmatprep.subr.mxu0 0.0
    %593 = vmatpush1.msra.mxu0 %v128
    %594 = vmatprep.subr.mxu0 0.0
    %595 = vmatpush1.msra.mxu0 %v129
    %596 = vmatprep.subr.mxu0 0.0
    %597 = vmatpush1.msra.mxu0 %v130
    %598 = vmatprep.subr.mxu0 0.0
    %599 = vmatpush1.msra.mxu0 %v131
    %600 = vmatprep.subr.mxu0 0.0
    %601 = vmatpush1.msra.mxu0 %v132
    %602 = vmatprep.subr.mxu0 0.0
    %603 = vmatpush1.msra.mxu0 %v133
    %604 = vmatprep.subr.mxu0 0.0
    %605 = vmatpush1.msra.mxu0 %v134
    %606 = vmatprep.subr.mxu0 0.0
    %607 = vmatpush1.msra.mxu0 0.0
    %608 = vmatprep.subr.mxu0 0.0
    %609 = vmatpush1.msra.mxu0 0.0
    %610 = vmatprep.subr.mxu0 0.0
    %611 = vmatpush1.msra.mxu0 0.0
    %612 = vmatprep.subr.mxu0 0.0
    %613 = vmatpush1.msra.mxu0 0.0
    %614 = vmatprep.subr.mxu0 0.0
    %615 = vmatpush1.msra.mxu0 0.0
    %616 = vmatprep.subr.mxu0 0.0
    %617 = vmatpush1.msra.mxu0 0.0
    %618 = vmatprep.subr.mxu0 0.0
    %619 = vmatpush1.msra.mxu0 0.0
    %620 = vmatprep.subr.mxu0 0.0
    %621 = vmatpush1.msra.mxu0 0.0
    %622 = vmatprep.subr.mxu0 0.0
    %623 = vmatpush1.msra.mxu0 0.0
    %624 = vmatprep.subr.mxu0 0.0
    %625 = vmatpush1.msra.mxu0 0.0
    %626 = vmatprep.subr.mxu0 0.0
    %627 = vmatpush1.msra.mxu0 0.0
    %628 = vmatprep.subr.mxu0 0.0
    %629 = vmatpush1.msra.mxu0 0.0
    %630 = vmatprep.subr.mxu0 0.0
    %631 = vmatpush1.msra.mxu0 0.0
    %632 = vmatprep.subr.mxu0 0.0
    %633 = vmatpush1.msra.mxu0 0.0
    %634 = vmatprep.subr.mxu0 0.0
    %635 = vmatpush1.msra.mxu0 0.0
    %636 = vmatprep.subr.mxu0 0.0
    %637 = vmatpush1.msra.mxu0 0.0
    %638 = vmatprep.mubr.f32.mxu0 0.0
    %639 = vmatmul.mubr.f32.gmra.mrb[0].mxu0 %v571
    %v640 = vpop.f32.mrb[0].mxu0
    %v641 = vadd.f32 %v572, %v640
    %v642 = vpop.f32.mrb[0].mxu0
    %643 = vdwg.mxu0
    %v644 = vtanh.pop %v641
    %v645 = vrot.slane %v116, 7
    %647 = vmatprep.subr.mxu0 0.0
    %648 = vmatpush1.msra.mxu0 %v119
    %649 = vmatprep.subr.mxu0 0.0
    %650 = vmatpush1.msra.mxu0 %v120
    %651 = vmatprep.subr.mxu0 0.0
    %652 = vmatpush1.msra.mxu0 %v121
    %653 = vmatprep.subr.mxu0 0.0
    %654 = vmatpush1.msra.mxu0 %v122
    %655 = vmatprep.subr.mxu0 0.0
    %656 = vmatpush1.msra.mxu0 %v123
    %657 = vmatprep.subr.mxu0 0.0
    %658 = vmatpush1.msra.mxu0 %v124
    %659 = vmatprep.subr.mxu0 0.0
    %660 = vmatpush1.msra.mxu0 %v125
    %661 = vmatprep.subr.mxu0 0.0
    %662 = vmatpush1.msra.mxu0 %v126
    %663 = vmatprep.subr.mxu0 0.0
    %664 = vmatpush1.msra.mxu0 %v127
    %665 = vmatprep.subr.mxu0 0.0
    %666 = vmatpush1.msra.mxu0 %v128
    %667 = vmatprep.subr.mxu0 0.0
    %668 = vmatpush1.msra.mxu0 %v129
    %669 = vmatprep.subr.mxu0 0.0
    %670 = vmatpush1.msra.mxu0 %v130
    %671 = vmatprep.subr.mxu0 0.0
    %672 = vmatpush1.msra.mxu0 %v131
    %673 = vmatprep.subr.mxu0 0.0
    %674 = vmatpush1.msra.mxu0 %v132
    %675 = vmatprep.subr.mxu0 0.0
    %676 = vmatpush1.msra.mxu0 %v133
    %677 = vmatprep.subr.mxu0 0.0
    %678 = vmatpush1.msra.mxu0 %v134
    %679 = vmatprep.subr.mxu0 0.0
    %680 = vmatpush1.msra.mxu0 0.0
    %681 = vmatprep.subr.mxu0 0.0
    %682 = vmatpush1.msra.mxu0 0.0
    %683 = vmatprep.subr.mxu0 0.0
    %684 = vmatpush1.msra.mxu0 0.0
    %685 = vmatprep.subr.mxu0 0.0
    %686 = vmatpush1.msra.mxu0 0.0
    %687 = vmatprep.subr.mxu0 0.0
    %688 = vmatpush1.msra.mxu0 0.0
    %689 = vmatprep.subr.mxu0 0.0
    %690 = vmatpush1.msra.mxu0 0.0
    %691 = vmatprep.subr.mxu0 0.0
    %692 = vmatpush1.msra.mxu0 0.0
    %693 = vmatprep.subr.mxu0 0.0
    %694 = vmatpush1.msra.mxu0 0.0
    %695 = vmatprep.subr.mxu0 0.0
    %696 = vmatpush1.msra.mxu0 0.0
    %697 = vmatprep.subr.mxu0 0.0
    %698 = vmatpush1.msra.mxu0 0.0
    %699 = vmatprep.subr.mxu0 0.0
    %700 = vmatpush1.msra.mxu0 0.0
    %701 = vmatprep.subr.mxu0 0.0
    %702 = vmatpush1.msra.mxu0 0.0
    %703 = vmatprep.subr.mxu0 0.0
    %704 = vmatpush1.msra.mxu0 0.0
    %705 = vmatprep.subr.mxu0 0.0
    %706 = vmatpush1.msra.mxu0 0.0
    %707 = vmatprep.subr.mxu0 0.0
    %708 = vmatpush1.msra.mxu0 0.0
    %709 = vmatprep.subr.mxu0 0.0
    %710 = vmatpush1.msra.mxu0 0.0
    %711 = vmatprep.mubr.f32.mxu0 0.0
    %712 = vmatmul.mubr.f32.gmra.mrb[0].mxu0 %v644
    %v713 = vpop.f32.mrb[0].mxu0
    %v714 = vadd.f32 %v645, %v713
    %v715 = vpop.f32.mrb[0].mxu0
    %716 = vdwg.mxu0
    %v717 = vtanh.pop %v714
    %v719 = vrot.slane %v279, 7
    %v722 = vrot.slane %v352, 6
    %v725 = vrot.slane %v425, 5
    %v728 = vrot.slane %v498, 4
    %v731 = vrot.slane %v571, 3
    %v734 = vrot.slane %v644, 2
    %v737 = vrot.slane %v717, 1
    %vm739 = vcmask 1040384
    %v740 = vsel %vm739, %v205, %v719
    %vm741 = vcmask 1041408
    %v742 = vsel %vm741, %v740, %v722
    %vm743 = vcmask 1042432
    %v744 = vsel %vm743, %v742, %v725
    %v745 = vsel %vm45, %v744, %v728
    %vm746 = vcmask 1044480
    %v747 = vsel %vm746, %v745, %v731
    %vm748 = vcmask 1045504
    %v749 = vsel %vm748, %v747, %v734
    %vm750 = vcmask 1046528
    %v751 = vsel %vm750, %v749, %v737
    %752 = vst [vmem:[#allocation5] sm:$0xff] %v751
    // Predicated region
    $region22: #{tpu_custom_call.1} parent=1 // pred_check
      _
    $region23: #{tpu_custom_call.1} parent=1 // pred_check_branch
      %754 = sbr.rel (0) target = $region25
    $region24: #{tpu_custom_call.1} parent=1 // pred_region
      %s756 = ssub.s32 128, 128
      %757 = vsyncadd [#allocation4], %s756
      %s759 = sshll.u32 [#allocation5], 4
      %s760 = int_to_ptr.vmem [resolvable:$true] %s759
      %762 = dma.vmem_to_hbm [thread:$0]  %s760, 128, %s4, [#allocation4]
    $region25: #{tpu_custom_call.1} parent=1 // pred_fallthru
      _
    // Predicated region
    $region26: #{tpu_custom_call.1} parent=1 // pred_check
      _
    $region27: #{tpu_custom_call.1} parent=1 // pred_check_branch
      %764 = sbr.rel (0) target = $region29
    $region28: #{tpu_custom_call.1} parent=1 // pred_region
      %765 = dma.done [#allocation4], 128
    $region29: #{tpu_custom_call.1} parent=1 // pred_fallthru
      _
    %766 = vsyncpa [#allocation3], 1
    %767 = vsyncpa [#allocation4], 1

</llo_original>
